<compile_context>
chip_gen: v7x
topology: tpu7x:2x2x1
jax: 0.10.0
libtpu: 0.0.40
codegen_flags: <defaults>
</compile_context>

<pallas_src>
import functools

import jax
import jax.numpy as jnp
from jax.experimental import pallas as pl
from jax.experimental.pallas import tpu as pltpu

ALPHA = 0.5
TEMPERATURE = 3.0
_NEG_INF = -1e30  # column padding for student logits: exp() underflows to exactly 0


def _round_up(x, m):
    return (x + m - 1) // m * m


def _pick_block_b(batch, c_pad, in_itemsize, vmem_budget_bytes=24 * 1024 * 1024):
    """Pick a batch-tile size that keeps the double-buffered pipeline well under VMEM.

    Budget: 2 inputs x 2 pipeline buffers in the input dtype plus ~8 live f32
    (TB, C) temporaries. 24 MiB leaves headroom under the 32 MiB scoped limit we
    request (v7x has only 64 MiB physical VMEM / 32 MiB scoped default).
    """
    bytes_per_row = c_pad * (2 * 2 * in_itemsize + 8 * 4)
    tb = max(8, vmem_budget_bytes // bytes_per_row)
    tb = min(tb, 512)                      # per-step overhead already amortized by 512 rows
    tb = min(tb, _round_up(batch, 8))      # don't over-pad small batches
    return max(8, int(tb) // 8 * 8)        # sublane-aligned


def _distill_loss_kernel(student_ref, teacher_ref, labels_ref, partial_ref, *,
                         alpha, inv_temperature, inv_batch):
    # One (TB, Cp) batch tile per grid step; all math in f32 regardless of input dtype.
    s = student_ref[...].astype(jnp.float32)        # (TB, Cp)
    t = teacher_ref[...].astype(jnp.float32)        # (TB, Cp)
    labels = labels_ref[...]                        # (TB, 1) int32 (-1 on padded rows)
    tb, cp = s.shape

    # Single shared cross-lane max (XLU): max(s / T) == max(s) / T since T > 0.
    m1 = jnp.max(s, axis=-1, keepdims=True)         # (TB, 1)
    s_t = s * inv_temperature
    m_t = m1 * inv_temperature

    # Tempered log-softmax (KL term).
    lse_t = jnp.log(jnp.sum(jnp.exp(s_t - m_t), axis=-1, keepdims=True)) + m_t
    log_p = s_t - lse_t                              # (TB, Cp)

    # Raw log-softmax (CE term).
    lse_1 = jnp.log(jnp.sum(jnp.exp(s - m1), axis=-1, keepdims=True)) + m1
    log_q = s - lse_1                                # (TB, Cp)

    # KL split: only the teacher-entropy term needs the t>0 mask; the cross term
    # sum(t * log_p) does not (t == 0 contributes exactly 0 since log_p is finite).
    safe_t = jnp.where(t > 0.0, t, 1.0)
    ent = jnp.where(t > 0.0, t * jnp.log(safe_t), 0.0)

    # CE: pick the label column with a one-hot select (padded rows carry label -1 -> 0,
    # padded columns have index >= num_classes -> never selected).
    col = jax.lax.broadcasted_iota(jnp.int32, (tb, cp), 1)
    pick = jnp.where(col == labels, log_q, 0.0)

    # Per-block contribution to alpha * KL_batchmean + (1 - alpha) * CE_mean.
    combined = alpha * (ent - t * log_p) - (1.0 - alpha) * pick
    partial_ref[0, 0] = jnp.sum(combined) * inv_batch


def distillation_loss(student_logits, teacher_probs, labels, *,
                      alpha=ALPHA, temperature=TEMPERATURE, block_b=None):
    """student_logits: (B, C) float (f32 or bf16), teacher_probs: (B, C) float, labels: (B,) int."""
    assert student_logits.shape == teacher_probs.shape
    batch, num_classes = student_logits.shape

    # Lane-align the class dim (multiple of 128) so loads/stores are unmasked.
    c_pad = _round_up(num_classes, 128)
    if c_pad != num_classes:
        student_logits = jnp.pad(student_logits, ((0, 0), (0, c_pad - num_classes)),
                                 constant_values=_NEG_INF)
        teacher_probs = jnp.pad(teacher_probs, ((0, 0), (0, c_pad - num_classes)))

    in_itemsize = max(student_logits.dtype.itemsize, teacher_probs.dtype.itemsize)
    tb = block_b if block_b is not None else _pick_block_b(batch, c_pad, in_itemsize)
    b_pad = _round_up(batch, tb)

    labels2d = labels.astype(jnp.int32).reshape(batch, 1)
    if b_pad != batch:
        student_logits = jnp.pad(student_logits, ((0, b_pad - batch), (0, 0)))
        teacher_probs = jnp.pad(teacher_probs, ((0, b_pad - batch), (0, 0)))
        labels2d = jnp.pad(labels2d, ((0, b_pad - batch), (0, 0)), constant_values=-1)

    num_blocks = b_pad // tb
    kernel = functools.partial(
        _distill_loss_kernel,
        alpha=float(alpha),
        inv_temperature=1.0 / float(temperature),
        inv_batch=1.0 / float(batch),
    )

    partials = pl.pallas_call(
        kernel,
        out_shape=jax.ShapeDtypeStruct((num_blocks, 1), jnp.float32),
        grid_spec=pltpu.PrefetchScalarGridSpec(
            num_scalar_prefetch=0,
            grid=(num_blocks,),
            in_specs=[
                pl.BlockSpec((tb, c_pad), lambda i: (i, 0)),
                pl.BlockSpec((tb, c_pad), lambda i: (i, 0)),
                pl.BlockSpec((tb, 1), lambda i: (i, 0)),   # narrow int32 labels, not widened
            ],
            out_specs=pl.BlockSpec((1, 1), lambda i: (i, 0),
                                   memory_space=pltpu.MemorySpace.SMEM),
        ),
        compiler_params=pltpu.CompilerParams(
            dimension_semantics=("parallel",),   # independent batch blocks -> both TCs on v7x
            vmem_limit_bytes=32 * 1024 * 1024,
        ),
    )(student_logits, teacher_probs, labels2d)

    # Per-block partials are independent; the final reduce is a trivial JAX sum.
    return jnp.sum(partials)


def _reference(student_logits, teacher_probs, labels, alpha=ALPHA, temperature=TEMPERATURE):
    s = student_logits.astype(jnp.float32)
    t = teacher_probs.astype(jnp.float32)
    B = s.shape[0]
    log_p = jax.nn.log_softmax(s / temperature, axis=-1)
    kl_pw = jnp.where(t > 0, t * (jnp.log(jnp.where(t > 0, t, 1.0)) - log_p), 0.0)
    kl = jnp.sum(kl_pw) / B
    log_q = jax.nn.log_softmax(s, axis=-1)
    ce = -jnp.mean(jnp.take_along_axis(log_q, labels[:, None].astype(jnp.int32), axis=-1))
    return alpha * kl + (1 - alpha) * ce


if __name__ == "__main__":
    key = jax.random.PRNGKey(0)
    k1, k2, k3 = jax.random.split(key, 3)

    # Primary check: lane-aligned class dim, f32 inputs.
    B, C = 8, 128
    student_logits = jax.random.normal(k1, (B, C), dtype=jnp.float32)
    teacher_logits = jax.random.normal(k2, (B, C), dtype=jnp.float32)
    teacher_probs = jax.nn.softmax(teacher_logits / TEMPERATURE, axis=-1)
    labels = jax.random.randint(k3, (B,), 0, C, dtype=jnp.int32)

    loss = distillation_loss(student_logits, teacher_probs, labels)
    jax.block_until_ready(loss)
    ref = _reference(student_logits, teacher_probs, labels)
    assert jnp.allclose(loss, ref, rtol=1e-5, atol=1e-5), (loss, ref)

    # Second check: bf16 inputs (half the HBM traffic) + unaligned B/C exercising padding.
    k4, k5, k6 = jax.random.split(jax.random.PRNGKey(1), 3)
    B2, C2 = 6, 100
    s2 = jax.random.normal(k4, (B2, C2), dtype=jnp.float32).astype(jnp.bfloat16)
    t2 = jax.nn.softmax(jax.random.normal(k5, (B2, C2), dtype=jnp.float32) / TEMPERATURE,
                        axis=-1).astype(jnp.bfloat16)
    labels2 = jax.random.randint(k6, (B2,), 0, C2, dtype=jnp.int32)
    loss2 = distillation_loss(s2, t2, labels2)
    jax.block_until_ready(loss2)
    ref2 = _reference(s2, t2, labels2)
    assert jnp.allclose(loss2, ref2, rtol=1e-4, atol=1e-4), (loss2, ref2)

    print("KERNEL_OK")
</pallas_src>

<mosaic_0001>
module attributes {stable_mosaic.version = 11 : i64} {
  func.func @_distill_loss_kernel(%arg0: i32, %arg1: memref<8x128xf32, #tpu.memory_space<vmem>>, %arg2: memref<8x128xf32, #tpu.memory_space<vmem>>, %arg3: memref<8x1xi32, #tpu.memory_space<vmem>>, %arg4: memref<1x1xf32, #tpu.memory_space<smem>>) attributes {dimension_semantics = [#tpu.dimension_semantics<parallel>], iteration_bounds = array<i64: 1>, scalar_prefetch = 0 : i64, scratch_operands = 0 : i64, tpu.core_type = #tpu.core_type<tc>, window_params = [{transform_indices = @transform_0, window_bounds = array<i64: 8, 128>}, {transform_indices = @transform_1, window_bounds = array<i64: 8, 128>}, {transform_indices = @transform_2, window_bounds = array<i64: 8, 1>}, {transform_indices = @transform_3, window_bounds = array<i64: 1, 1>}]} {
    %c0 = arith.constant 0 : index
    %c0_0 = arith.constant 0 : index
    %0 = vector.load %arg1[%c0, %c0_0] : memref<8x128xf32, #tpu.memory_space<vmem>>, vector<8x128xf32>
    %c0_1 = arith.constant 0 : index
    %c0_2 = arith.constant 0 : index
    %1 = vector.load %arg2[%c0_1, %c0_2] : memref<8x128xf32, #tpu.memory_space<vmem>>, vector<8x128xf32>
    %c0_3 = arith.constant 0 : index
    %c0_4 = arith.constant 0 : index
    %2 = vector.load %arg3[%c0_3, %c0_4] : memref<8x1xi32, #tpu.memory_space<vmem>>, vector<8x1xi32>
    %cst = arith.constant dense<0xFF800000> : vector<8xf32>
    %3 = vector.multi_reduction <maximumf>, %0, %cst [1] : vector<8x128xf32> to vector<8xf32>
    %4 = vector.shape_cast %3 : vector<8xf32> to vector<8x1xf32>
    %cst_5 = arith.constant 0.333333343 : f32
    %5 = vector.broadcast %cst_5 : f32 to vector<8x128xf32>
    %6 = arith.mulf %0, %5 : vector<8x128xf32>
    %cst_6 = arith.constant 0.333333343 : f32
    %7 = vector.broadcast %cst_6 : f32 to vector<8x1xf32>
    %8 = arith.mulf %4, %7 : vector<8x1xf32>
    %9 = vector.broadcast %8 : vector<8x1xf32> to vector<8x128xf32>
    %10 = arith.subf %6, %9 : vector<8x128xf32>
    %11 = math.exp %10 : vector<8x128xf32>
    %cst_7 = arith.constant dense<0.000000e+00> : vector<8xf32>
    %12 = vector.multi_reduction <add>, %11, %cst_7 [1] : vector<8x128xf32> to vector<8xf32>
    %13 = vector.shape_cast %12 : vector<8xf32> to vector<8x1xf32>
    %14 = math.log %13 : vector<8x1xf32>
    %15 = arith.addf %14, %8 : vector<8x1xf32>
    %16 = vector.broadcast %15 : vector<8x1xf32> to vector<8x128xf32>
    %17 = arith.subf %6, %16 : vector<8x128xf32>
    %18 = vector.broadcast %4 : vector<8x1xf32> to vector<8x128xf32>
    %19 = arith.subf %0, %18 : vector<8x128xf32>
    %20 = math.exp %19 : vector<8x128xf32>
    %cst_8 = arith.constant dense<0.000000e+00> : vector<8xf32>
    %21 = vector.multi_reduction <add>, %20, %cst_8 [1] : vector<8x128xf32> to vector<8xf32>
    %22 = vector.shape_cast %21 : vector<8xf32> to vector<8x1xf32>
    %23 = math.log %22 : vector<8x1xf32>
    %24 = arith.addf %23, %4 : vector<8x1xf32>
    %25 = vector.broadcast %24 : vector<8x1xf32> to vector<8x128xf32>
    %26 = arith.subf %0, %25 : vector<8x128xf32>
    %cst_9 = arith.constant 0.000000e+00 : f32
    %27 = vector.broadcast %cst_9 : f32 to vector<8x128xf32>
    %28 = arith.cmpf ogt, %1, %27 : vector<8x128xf32>
    %cst_10 = arith.constant 1.000000e+00 : f32
    %29 = vector.broadcast %cst_10 : f32 to vector<8x128xf32>
    %30 = arith.select %28, %1, %29 : vector<8x128xi1>, vector<8x128xf32>
    %cst_11 = arith.constant 0.000000e+00 : f32
    %31 = vector.broadcast %cst_11 : f32 to vector<8x128xf32>
    %32 = arith.cmpf ogt, %1, %31 : vector<8x128xf32>
    %33 = math.log %30 : vector<8x128xf32>
    %34 = arith.mulf %1, %33 : vector<8x128xf32>
    %cst_12 = arith.constant 0.000000e+00 : f32
    %35 = vector.broadcast %cst_12 : f32 to vector<8x128xf32>
    %36 = arith.select %32, %34, %35 : vector<8x128xi1>, vector<8x128xf32>
    %37 = tpu.iota {dimensions = array<i32: 1>} : vector<8x128xi32>
    %38 = vector.broadcast %2 : vector<8x1xi32> to vector<8x128xi32>
    %39 = arith.cmpi eq, %37, %38 : vector<8x128xi32>
    %cst_13 = arith.constant 0.000000e+00 : f32
    %40 = vector.broadcast %cst_13 : f32 to vector<8x128xf32>
    %41 = arith.select %39, %26, %40 : vector<8x128xi1>, vector<8x128xf32>
    %42 = arith.mulf %1, %17 : vector<8x128xf32>
    %43 = arith.subf %36, %42 : vector<8x128xf32>
    %cst_14 = arith.constant 5.000000e-01 : f32
    %44 = vector.broadcast %cst_14 : f32 to vector<8x128xf32>
    %45 = arith.mulf %44, %43 : vector<8x128xf32>
    %cst_15 = arith.constant 5.000000e-01 : f32
    %46 = vector.broadcast %cst_15 : f32 to vector<8x128xf32>
    %47 = arith.mulf %46, %41 : vector<8x128xf32>
    %48 = arith.subf %45, %47 : vector<8x128xf32>
    %49 = vector.shape_cast %48 : vector<8x128xf32> to vector<1x8x128xf32>
    %cst_16 = arith.constant dense<0.000000e+00> : vector<1xf32>
    %50 = vector.multi_reduction <add>, %49, %cst_16 [1, 2] : vector<1x8x128xf32> to vector<1xf32>
    %51 = vector.shape_cast %50 : vector<1xf32> to vector<1x1x1xf32>
    %52 = vector.extract %51[0, 0, 0] : f32 from vector<1x1x1xf32>
    %cst_17 = arith.constant 1.250000e-01 : f32
    %53 = arith.mulf %52, %cst_17 : f32
    %c0_18 = arith.constant 0 : index
    %c0_19 = arith.constant 0 : index
    %54 = memref.load %arg4[%c0_18, %c0_19] : memref<1x1xf32, #tpu.memory_space<smem>>
    memref.store %53, %arg4[%c0_18, %c0_19] : memref<1x1xf32, #tpu.memory_space<smem>>
    return
  }
  func.func @transform_0(%arg0: i32) -> (i32, i32) {
    %c0_i32 = arith.constant 0 : i32
    %c0_i32_0 = arith.constant 0 : i32
    return %arg0, %c0_i32 : i32, i32
  }
  func.func @transform_1(%arg0: i32) -> (i32, i32) {
    %c0_i32 = arith.constant 0 : i32
    %c0_i32_0 = arith.constant 0 : i32
    return %arg0, %c0_i32 : i32, i32
  }
  func.func @transform_2(%arg0: i32) -> (i32, i32) {
    %c0_i32 = arith.constant 0 : i32
    %c0_i32_0 = arith.constant 0 : i32
    return %arg0, %c0_i32 : i32, i32
  }
  func.func @transform_3(%arg0: i32) -> (i32, i32) {
    %c0_i32 = arith.constant 0 : i32
    %c0_i32_0 = arith.constant 0 : i32
    return %arg0, %c0_i32 : i32, i32
  }
}

</mosaic_0001>

<llo_original>
// kernel: tpu_custom_call.1
$region0: #{tpu_custom_call.1}
  #allocation0 [shape = 'u32[]', space=smem, size = 0x4, offset = 0x4, fixed_abs, tag = 'smem constant byte address 0x4 - core index']
  #allocation1 [shape = 'u32[144,128]{1,0:T(1,128)}', space=vmem, size = 0x12000, scoped, tag = 'internal scratch']
  %s0 = inlined_call_operand.vmem [shape: f32[8,128], index: 0, kind: input, shape index: {}]
  %s1 = inlined_call_operand.hbm [shape: f32[8,128], index: 1, kind: input, shape index: {}]
  %s2 = inlined_call_operand.vmem [shape: s32[8,1], index: 2, kind: input, shape index: {}]
  %s3 = inlined_call_operand.hbm [shape: f32[1,1], index: 3, kind: output, shape index: {}]
  %s4 = sld [smem:[#allocation0]]
  $region26: #{tpu_custom_call.1} parent=0
    _
  %s6 = ssub.s32 1, %s4
  %s7 = scalar_select 0, %s6, %s4
  $region1: #{tpu_custom_call.1} parent=0
    #allocation2 [shape = 'u8[4096]{0}', space=vmem, size = 0x1000, scoped, tag = 'input window, operand 1, single buffered']
    #allocation3 [shape = 's32[1]{0}', space=sflag, size = 0x4, scoped, tag = 'scoped memory for tpu_custom_call.1']
    #allocation4 [shape = 's32[1]{0}', space=sflag, size = 0x4, scoped, tag = 'scoped memory for tpu_custom_call.1']
    #allocation5 [shape = 'u8[512]{0}', space=smem, size = 0x200, scoped, tag = 'output window, operand 0, single buffered']
    %8 = vsyncpa [#allocation3], 0
    %9 = vsyncpa [#allocation4], 0
    // Predicated region
    $region2: #{tpu_custom_call.1} parent=1 // pred_check
      _
    $region3: #{tpu_custom_call.1} parent=1 // pred_check_branch
      %11 = sbr.rel (0) target = $region5
    $region4: #{tpu_custom_call.1} parent=1 // pred_region
      _
    $region5: #{tpu_custom_call.1} parent=1 // pred_fallthru
      _
    // Predicated region
    $region6: #{tpu_custom_call.1} parent=1 // pred_check
      _
    $region7: #{tpu_custom_call.1} parent=1 // pred_check_branch
      %13 = sbr.rel (0) target = $region9
    $region8: #{tpu_custom_call.1} parent=1 // pred_region
      %s15 = ssub.s32 128, 128
      %16 = vsyncadd [#allocation3], %s15
      %s18 = sshll.u32 [#allocation2], 4
      %s19 = int_to_ptr.vmem [resolvable:$true] %s18
      %21 = dma.hbm_to_vmem [thread:$0]  %s1, 128, %s19, [#allocation3]
    $region9: #{tpu_custom_call.1} parent=1 // pred_fallthru
      _
    // Predicated region
    $region10: #{tpu_custom_call.1} parent=1 // pred_check
      _
    $region11: #{tpu_custom_call.1} parent=1 // pred_check_branch
      %23 = sbr.rel (0) target = $region13
    $region12: #{tpu_custom_call.1} parent=1 // pred_region
      _
    $region13: #{tpu_custom_call.1} parent=1 // pred_fallthru
      _
    // Predicated region
    $region14: #{tpu_custom_call.1} parent=1 // pred_check
      _
    $region15: #{tpu_custom_call.1} parent=1 // pred_check_branch
      %25 = sbr.rel (0) target = $region17
    $region16: #{tpu_custom_call.1} parent=1 // pred_region
      %26 = dma.done [#allocation3], 128
    $region17: #{tpu_custom_call.1} parent=1 // pred_fallthru
      _
    %v27 = vld [vmem:[%s0] sm:$0xff]
    %v28 = vld [vmem:[#allocation2] sm:$0xff]
    %v29 = vld [vmem:[%s2] sm:$0xff]
    %30 = vmax.xlane.f32.xlu0 %v27
    %v31 = vpop.xlane.xlu0 %30
    %v32 = vmul.f32 %v27, 0.33333334
    %v33 = vmul.f32 %v31, 0.33333334
    %v34 = vsub.f32 %v32, %v33
    %v35 = vmul.f32 %v34, 1.442695
    %v36 = vpow.pop %v35
    %37 = vadd.xlane.f32.xlu0 %v36
    %v38 = vpop.xlane.xlu0 %37
    %v39 = vlog2.pop %v38
    %v40 = vmul.f32 %v39, 0.6931472
    %v41 = vadd.f32 %v40, %v33
    %v42 = vsub.f32 %v32, %v41
    %v43 = vsub.f32 %v27, %v31
    %v44 = vmul.f32 %v43, 1.442695
    %v45 = vpow.pop %v44
    %46 = vadd.xlane.f32.xlu0 %v45
    %v47 = vpop.xlane.xlu0 %46
    %v48 = vlog2.pop %v47
    %v49 = vmul.f32 %v48, 0.6931472
    %v50 = vadd.f32 %v49, %v31
    %v51 = vsub.f32 %v27, %v50
    %vm52 = vcmp.gt.f32.partialorder %v28, 0.0
    %v53 = vsel %vm52, %v28, 1.0
    %v54 = vlog2.pop %v53
    %v55 = vmul.f32 %v54, 0.6931472
    %v56 = vmul.f32 %v28, %v55
    %v57 = vsel %vm52, %v56, 0.0
    %v58 = vlaneseq
    %v59 = vand.u32 %v58, 127
    %60 = vset.pattern.permute.xlu0 0
    %61 = vperm.xlu0 %60, %v29
    %v62 = vpop.permute.xlu0 %61
    %vm63 = vcmp.eq.s32.totalorder %v59, %v62
    %v64 = vsel %vm63, %v51, 0.0
    %v65 = vmul.f32 %v28, %v42
    %v66 = vsub.f32 %v57, %v65
    %v67 = vmul.f32 %v66, 0.5
    %v68 = vmul.f32 %v64, 0.5
    %v69 = vsub.f32 %v67, %v68
    %70 = vadd.xlane.f32.xlu0 %v69
    %v71 = vpop.xlane.xlu0 %70
    %v72 = vrot.slane %v71, 4
    %v73 = vadd.f32 %v71, %v72
    %v74 = vrot.slane %v73, 2
    %v75 = vadd.f32 %v73, %v74
    %v76 = vrot.slane %v75, 1
    %v77 = vadd.f32 %v75, %v76
    %s78 = vtos %v77
    %s79 = smul.f32 %s78, 0.125
    %s80 = scalar_lea.smem [#allocation5], 0
    %81 = sst [smem:[%s80]] %s79
    // Predicated region
    $region18: #{tpu_custom_call.1} parent=1 // pred_check
      _
    $region19: #{tpu_custom_call.1} parent=1 // pred_check_branch
      %83 = sbr.rel (0) target = $region21
    $region20: #{tpu_custom_call.1} parent=1 // pred_region
      %s85 = ssub.s32 16, 16
      %86 = vsyncadd [#allocation4], %s85
      %89 = dma.smem_to_hbm [#allocation5], 16, %s3, [#allocation4]
    $region21: #{tpu_custom_call.1} parent=1 // pred_fallthru
      _
    // Predicated region
    $region22: #{tpu_custom_call.1} parent=1 // pred_check
      _
    $region23: #{tpu_custom_call.1} parent=1 // pred_check_branch
      %91 = sbr.rel (0) target = $region25
    $region24: #{tpu_custom_call.1} parent=1 // pred_region
      %92 = dma.done [#allocation4], 16
    $region25: #{tpu_custom_call.1} parent=1 // pred_fallthru
      _
    %93 = sfence
    %94 = vsyncpa [#allocation3], 1
    %95 = vsyncpa [#allocation4], 1

</llo_original>
